<compile_context>
chip_gen: v7x
topology: tpu7x:2x2x1
jax: 0.10.0
libtpu: 0.0.40
codegen_flags: <defaults>
</compile_context>

<pallas_src>
import jax
import jax.numpy as jnp
from jax.experimental import pallas as pl
from jax.experimental.pallas import tpu as pltpu

_LANES = 128
_SUBLANES = 8


def _round_up(x, m):
    return ((x + m - 1) // m) * m


def mlp_kernel(x_ref, w1_ref, b1_ref, w2_ref, b2_ref, o_ref):
    # x_ref: (in_dim, tile_rows, 128) in VMEM -- batch dense on (sublane, lane)
    # w1_ref: (hidden, in_dim), b1_ref: (hidden,), w2_ref: (out, hidden),
    # b2_ref: (out,) -- all in SMEM, read as scalars.
    in_dim = x_ref.shape[0]
    hidden = w1_ref.shape[0]
    out_dim = w2_ref.shape[0]

    x = [x_ref[k] for k in range(in_dim)]          # in_dim slabs of (rows, 128)
    slab_shape = x[0].shape

    # fc1 + ReLU: h[j] = relu(b1[j] + sum_k w1[j,k] * x[k])   (scalar*vector FMAs)
    h = []
    for j in range(hidden):
        acc = jnp.full(slab_shape, b1_ref[j], dtype=jnp.float32)
        for k in range(in_dim):
            acc = acc + w1_ref[j, k] * x[k]
        h.append(jnp.maximum(acc, 0.0))

    # fc2: logits[o] = b2[o] + sum_j w2[o,j] * h[j]
    logits = []
    for o in range(out_dim):
        acc = jnp.full(slab_shape, b2_ref[o], dtype=jnp.float32)
        for j in range(hidden):
            acc = acc + w2_ref[o, j] * h[j]
        logits.append(acc)

    # softmax over the out_dim class slabs (torch dim=1) -- purely elementwise.
    m = logits[0]
    for o in range(1, out_dim):
        m = jnp.maximum(m, logits[o])
    e = [jnp.exp(l - m) for l in logits]
    denom = e[0]
    for o in range(1, out_dim):
        denom = denom + e[o]
    inv = 1.0 / denom                              # exact f32 normalization
    for o in range(out_dim):
        o_ref[o] = (e[o] * inv).astype(o_ref.dtype)


def mlp_forward_slabs(x_slab, w1, b1, w2, b2, *, tile_rows):
    """Slab-layout entry point: x_slab (in_dim, rows, 128) -> (out_dim, rows, 128)."""
    in_dim, rows, lanes = x_slab.shape
    out_dim = w2.shape[0]
    assert lanes == _LANES and rows % tile_rows == 0

    grid = (rows // tile_rows,)
    return pl.pallas_call(
        mlp_kernel,
        out_shape=jax.ShapeDtypeStruct((out_dim, rows, lanes), jnp.float32),
        grid_spec=pltpu.PrefetchScalarGridSpec(
            num_scalar_prefetch=0,
            grid=grid,
            in_specs=[
                # x tile: (in_dim, tile_rows, 128), pipelined / double-buffered.
                pl.BlockSpec((in_dim, tile_rows, lanes), lambda i: (0, i, 0)),
                # Weights / biases: whole arrays in SMEM, read as scalars.
                pl.BlockSpec(memory_space=pltpu.MemorySpace.SMEM),  # w1
                pl.BlockSpec(memory_space=pltpu.MemorySpace.SMEM),  # b1
                pl.BlockSpec(memory_space=pltpu.MemorySpace.SMEM),  # w2
                pl.BlockSpec(memory_space=pltpu.MemorySpace.SMEM),  # b2
            ],
            out_specs=pl.BlockSpec((out_dim, tile_rows, lanes),
                                   lambda i: (0, i, 0)),
        ),
        compiler_params=pltpu.CompilerParams(
            # Batch axis is embarrassingly parallel (v7x megacore sharding).
            dimension_semantics=("parallel",),
            # Well above the few-MiB worst case, below v7x's 64 MiB physical.
            vmem_limit_bytes=48 * 1024 * 1024,
        ),
    )(x_slab, w1, b1, w2, b2)


def mlp_forward(x, w1, b1, w2, b2, *, tile_b=65536):
    """PyTorch-layout wrapper.

    x: (B, 4) f32; w1: (10, 4); b1: (10,); w2: (3, 10); b2: (3,).
    Returns softmax(relu(x @ w1.T + b1) @ w2.T + b2, axis=1), shape (B, 3).
    """
    B, in_dim = x.shape
    out_dim = w2.shape[0]

    rows = _round_up(pl.cdiv(B, _LANES), _SUBLANES)
    tile_rows = max(_SUBLANES, min(tile_b // _LANES, rows))
    tile_rows = max(_SUBLANES, (tile_rows // _SUBLANES) * _SUBLANES)
    # Keep >= 2 grid steps when there is enough work so both v7x TensorCores
    # get a share of the batch (harmless on single-TC v5e / v6e).
    if rows >= 2 * _SUBLANES:
        half = _round_up(pl.cdiv(rows, 2), _SUBLANES)
        tile_rows = min(tile_rows, half)
    rows_p = _round_up(rows, tile_rows)
    bp = rows_p * _LANES

    # Layout plumbing (fused by XLA under jit): (B, in) -> (in, rows_p, 128).
    x_t = x.T
    if bp != B:
        x_t = jnp.pad(x_t, ((0, 0), (0, bp - B)))
    x_slab = x_t.reshape(in_dim, rows_p, _LANES)

    out_slab = mlp_forward_slabs(x_slab, w1, b1, w2, b2, tile_rows=tile_rows)
    return out_slab.reshape(out_dim, bp)[:, :B].T


if __name__ == "__main__":
    key = jax.random.PRNGKey(0)
    kx, k1, kb1, k2, kb2 = jax.random.split(key, 5)

    # Small batch, deliberately not a multiple of 128 to exercise padding.
    B = 200
    x = jax.random.normal(kx, (B, 4), dtype=jnp.float32)
    # PyTorch-native parameter layout: weight (out_features, in_features), bias (out,).
    w1 = jax.random.normal(k1, (10, 4), dtype=jnp.float32) * 0.5
    b1 = jax.random.normal(kb1, (10,), dtype=jnp.float32) * 0.1
    w2 = jax.random.normal(k2, (3, 10), dtype=jnp.float32) * 0.5
    b2 = jax.random.normal(kb2, (3,), dtype=jnp.float32) * 0.1

    out = jax.jit(mlp_forward)(x, w1, b1, w2, b2)
    out = jax.block_until_ready(out)

    # Pure-JAX reference with PyTorch semantics, written as elementwise
    # multiply + sum (no matmul) so it is exact f32 regardless of the
    # backend's default matmul precision.
    h_ref = jnp.maximum(jnp.sum(x[:, None, :] * w1[None, :, :], axis=-1) + b1, 0.0)
    logits_ref = jnp.sum(h_ref[:, None, :] * w2[None, :, :], axis=-1) + b2
    ref = jax.nn.softmax(logits_ref, axis=1)

    assert out.shape == (B, 3)
    max_err = float(jnp.max(jnp.abs(out - ref)))
    assert max_err < 1e-4, f"mismatch vs reference: max abs err = {max_err:.3e}"

    print("KERNEL_OK")
</pallas_src>

<mosaic_0001>
module attributes {stable_mosaic.version = 11 : i64} {
  func.func @mlp_kernel(%arg0: i32, %arg1: memref<4x8x128xf32, #tpu.memory_space<vmem>>, %arg2: memref<10x4xf32, #tpu.memory_space<smem>>, %arg3: memref<10xf32, #tpu.memory_space<smem>>, %arg4: memref<3x10xf32, #tpu.memory_space<smem>>, %arg5: memref<3xf32, #tpu.memory_space<smem>>, %arg6: memref<3x8x128xf32, #tpu.memory_space<vmem>>) attributes {dimension_semantics = [#tpu.dimension_semantics<parallel>], iteration_bounds = array<i64: 1>, scalar_prefetch = 0 : i64, scratch_operands = 0 : i64, tpu.core_type = #tpu.core_type<tc>, window_params = [{transform_indices = @transform_0, window_bounds = array<i64: 4, 8, 128>}, {transform_indices = @transform_1, window_bounds = array<i64: 10, 4>}, {transform_indices = @transform_2, window_bounds = array<i64: 10>}, {transform_indices = @transform_3, window_bounds = array<i64: 3, 10>}, {transform_indices = @transform_4, window_bounds = array<i64: 3>}, {transform_indices = @transform_5, window_bounds = array<i64: 3, 8, 128>}]} {
    %c0 = arith.constant 0 : index
    %c0_0 = arith.constant 0 : index
    %c0_1 = arith.constant 0 : index
    %0 = vector.load %arg1[%c0, %c0_0, %c0_1] : memref<4x8x128xf32, #tpu.memory_space<vmem>>, vector<1x8x128xf32>
    %1 = vector.shape_cast %0 : vector<1x8x128xf32> to vector<8x128xf32>
    %c1 = arith.constant 1 : index
    %c0_2 = arith.constant 0 : index
    %c0_3 = arith.constant 0 : index
    %2 = vector.load %arg1[%c1, %c0_2, %c0_3] : memref<4x8x128xf32, #tpu.memory_space<vmem>>, vector<1x8x128xf32>
    %3 = vector.shape_cast %2 : vector<1x8x128xf32> to vector<8x128xf32>
    %c2 = arith.constant 2 : index
    %c0_4 = arith.constant 0 : index
    %c0_5 = arith.constant 0 : index
    %4 = vector.load %arg1[%c2, %c0_4, %c0_5] : memref<4x8x128xf32, #tpu.memory_space<vmem>>, vector<1x8x128xf32>
    %5 = vector.shape_cast %4 : vector<1x8x128xf32> to vector<8x128xf32>
    %c3 = arith.constant 3 : index
    %c0_6 = arith.constant 0 : index
    %c0_7 = arith.constant 0 : index
    %6 = vector.load %arg1[%c3, %c0_6, %c0_7] : memref<4x8x128xf32, #tpu.memory_space<vmem>>, vector<1x8x128xf32>
    %7 = vector.shape_cast %6 : vector<1x8x128xf32> to vector<8x128xf32>
    %c0_8 = arith.constant 0 : index
    %8 = memref.load %arg3[%c0_8] : memref<10xf32, #tpu.memory_space<smem>>
    %9 = vector.broadcast %8 : f32 to vector<8x128xf32>
    %c0_9 = arith.constant 0 : index
    %c0_10 = arith.constant 0 : index
    %10 = memref.load %arg2[%c0_9, %c0_10] : memref<10x4xf32, #tpu.memory_space<smem>>
    %11 = vector.broadcast %10 : f32 to vector<8x128xf32>
    %12 = arith.mulf %11, %1 : vector<8x128xf32>
    %13 = arith.addf %9, %12 : vector<8x128xf32>
    %c0_11 = arith.constant 0 : index
    %c1_12 = arith.constant 1 : index
    %14 = memref.load %arg2[%c0_11, %c1_12] : memref<10x4xf32, #tpu.memory_space<smem>>
    %15 = vector.broadcast %14 : f32 to vector<8x128xf32>
    %16 = arith.mulf %15, %3 : vector<8x128xf32>
    %17 = arith.addf %13, %16 : vector<8x128xf32>
    %c0_13 = arith.constant 0 : index
    %c2_14 = arith.constant 2 : index
    %18 = memref.load %arg2[%c0_13, %c2_14] : memref<10x4xf32, #tpu.memory_space<smem>>
    %19 = vector.broadcast %18 : f32 to vector<8x128xf32>
    %20 = arith.mulf %19, %5 : vector<8x128xf32>
    %21 = arith.addf %17, %20 : vector<8x128xf32>
    %c0_15 = arith.constant 0 : index
    %c3_16 = arith.constant 3 : index
    %22 = memref.load %arg2[%c0_15, %c3_16] : memref<10x4xf32, #tpu.memory_space<smem>>
    %23 = vector.broadcast %22 : f32 to vector<8x128xf32>
    %24 = arith.mulf %23, %7 : vector<8x128xf32>
    %25 = arith.addf %21, %24 : vector<8x128xf32>
    %cst = arith.constant 0.000000e+00 : f32
    %26 = vector.broadcast %cst : f32 to vector<8x128xf32>
    %27 = arith.maximumf %25, %26 : vector<8x128xf32>
    %c1_17 = arith.constant 1 : index
    %28 = memref.load %arg3[%c1_17] : memref<10xf32, #tpu.memory_space<smem>>
    %29 = vector.broadcast %28 : f32 to vector<8x128xf32>
    %c1_18 = arith.constant 1 : index
    %c0_19 = arith.constant 0 : index
    %30 = memref.load %arg2[%c1_18, %c0_19] : memref<10x4xf32, #tpu.memory_space<smem>>
    %31 = vector.broadcast %30 : f32 to vector<8x128xf32>
    %32 = arith.mulf %31, %1 : vector<8x128xf32>
    %33 = arith.addf %29, %32 : vector<8x128xf32>
    %c1_20 = arith.constant 1 : index
    %c1_21 = arith.constant 1 : index
    %34 = memref.load %arg2[%c1_20, %c1_21] : memref<10x4xf32, #tpu.memory_space<smem>>
    %35 = vector.broadcast %34 : f32 to vector<8x128xf32>
    %36 = arith.mulf %35, %3 : vector<8x128xf32>
    %37 = arith.addf %33, %36 : vector<8x128xf32>
    %c1_22 = arith.constant 1 : index
    %c2_23 = arith.constant 2 : index
    %38 = memref.load %arg2[%c1_22, %c2_23] : memref<10x4xf32, #tpu.memory_space<smem>>
    %39 = vector.broadcast %38 : f32 to vector<8x128xf32>
    %40 = arith.mulf %39, %5 : vector<8x128xf32>
    %41 = arith.addf %37, %40 : vector<8x128xf32>
    %c1_24 = arith.constant 1 : index
    %c3_25 = arith.constant 3 : index
    %42 = memref.load %arg2[%c1_24, %c3_25] : memref<10x4xf32, #tpu.memory_space<smem>>
    %43 = vector.broadcast %42 : f32 to vector<8x128xf32>
    %44 = arith.mulf %43, %7 : vector<8x128xf32>
    %45 = arith.addf %41, %44 : vector<8x128xf32>
    %cst_26 = arith.constant 0.000000e+00 : f32
    %46 = vector.broadcast %cst_26 : f32 to vector<8x128xf32>
    %47 = arith.maximumf %45, %46 : vector<8x128xf32>
    %c2_27 = arith.constant 2 : index
    %48 = memref.load %arg3[%c2_27] : memref<10xf32, #tpu.memory_space<smem>>
    %49 = vector.broadcast %48 : f32 to vector<8x128xf32>
    %c2_28 = arith.constant 2 : index
    %c0_29 = arith.constant 0 : index
    %50 = memref.load %arg2[%c2_28, %c0_29] : memref<10x4xf32, #tpu.memory_space<smem>>
    %51 = vector.broadcast %50 : f32 to vector<8x128xf32>
    %52 = arith.mulf %51, %1 : vector<8x128xf32>
    %53 = arith.addf %49, %52 : vector<8x128xf32>
    %c2_30 = arith.constant 2 : index
    %c1_31 = arith.constant 1 : index
    %54 = memref.load %arg2[%c2_30, %c1_31] : memref<10x4xf32, #tpu.memory_space<smem>>
    %55 = vector.broadcast %54 : f32 to vector<8x128xf32>
    %56 = arith.mulf %55, %3 : vector<8x128xf32>
    %57 = arith.addf %53, %56 : vector<8x128xf32>
    %c2_32 = arith.constant 2 : index
    %c2_33 = arith.constant 2 : index
    %58 = memref.load %arg2[%c2_32, %c2_33] : memref<10x4xf32, #tpu.memory_space<smem>>
    %59 = vector.broadcast %58 : f32 to vector<8x128xf32>
    %60 = arith.mulf %59, %5 : vector<8x128xf32>
    %61 = arith.addf %57, %60 : vector<8x128xf32>
    %c2_34 = arith.constant 2 : index
    %c3_35 = arith.constant 3 : index
    %62 = memref.load %arg2[%c2_34, %c3_35] : memref<10x4xf32, #tpu.memory_space<smem>>
    %63 = vector.broadcast %62 : f32 to vector<8x128xf32>
    %64 = arith.mulf %63, %7 : vector<8x128xf32>
    %65 = arith.addf %61, %64 : vector<8x128xf32>
    %cst_36 = arith.constant 0.000000e+00 : f32
    %66 = vector.broadcast %cst_36 : f32 to vector<8x128xf32>
    %67 = arith.maximumf %65, %66 : vector<8x128xf32>
    %c3_37 = arith.constant 3 : index
    %68 = memref.load %arg3[%c3_37] : memref<10xf32, #tpu.memory_space<smem>>
    %69 = vector.broadcast %68 : f32 to vector<8x128xf32>
    %c3_38 = arith.constant 3 : index
    %c0_39 = arith.constant 0 : index
    %70 = memref.load %arg2[%c3_38, %c0_39] : memref<10x4xf32, #tpu.memory_space<smem>>
    %71 = vector.broadcast %70 : f32 to vector<8x128xf32>
    %72 = arith.mulf %71, %1 : vector<8x128xf32>
    %73 = arith.addf %69, %72 : vector<8x128xf32>
    %c3_40 = arith.constant 3 : index
    %c1_41 = arith.constant 1 : index
    %74 = memref.load %arg2[%c3_40, %c1_41] : memref<10x4xf32, #tpu.memory_space<smem>>
    %75 = vector.broadcast %74 : f32 to vector<8x128xf32>
    %76 = arith.mulf %75, %3 : vector<8x128xf32>
    %77 = arith.addf %73, %76 : vector<8x128xf32>
    %c3_42 = arith.constant 3 : index
    %c2_43 = arith.constant 2 : index
    %78 = memref.load %arg2[%c3_42, %c2_43] : memref<10x4xf32, #tpu.memory_space<smem>>
    %79 = vector.broadcast %78 : f32 to vector<8x128xf32>
    %80 = arith.mulf %79, %5 : vector<8x128xf32>
    %81 = arith.addf %77, %80 : vector<8x128xf32>
    %c3_44 = arith.constant 3 : index
    %c3_45 = arith.constant 3 : index
    %82 = memref.load %arg2[%c3_44, %c3_45] : memref<10x4xf32, #tpu.memory_space<smem>>
    %83 = vector.broadcast %82 : f32 to vector<8x128xf32>
    %84 = arith.mulf %83, %7 : vector<8x128xf32>
    %85 = arith.addf %81, %84 : vector<8x128xf32>
    %cst_46 = arith.constant 0.000000e+00 : f32
    %86 = vector.broadcast %cst_46 : f32 to vector<8x128xf32>
    %87 = arith.maximumf %85, %86 : vector<8x128xf32>
    %c4 = arith.constant 4 : index
    %88 = memref.load %arg3[%c4] : memref<10xf32, #tpu.memory_space<smem>>
    %89 = vector.broadcast %88 : f32 to vector<8x128xf32>
    %c4_47 = arith.constant 4 : index
    %c0_48 = arith.constant 0 : index
    %90 = memref.load %arg2[%c4_47, %c0_48] : memref<10x4xf32, #tpu.memory_space<smem>>
    %91 = vector.broadcast %90 : f32 to vector<8x128xf32>
    %92 = arith.mulf %91, %1 : vector<8x128xf32>
    %93 = arith.addf %89, %92 : vector<8x128xf32>
    %c4_49 = arith.constant 4 : index
    %c1_50 = arith.constant 1 : index
    %94 = memref.load %arg2[%c4_49, %c1_50] : memref<10x4xf32, #tpu.memory_space<smem>>
    %95 = vector.broadcast %94 : f32 to vector<8x128xf32>
    %96 = arith.mulf %95, %3 : vector<8x128xf32>
    %97 = arith.addf %93, %96 : vector<8x128xf32>
    %c4_51 = arith.constant 4 : index
    %c2_52 = arith.constant 2 : index
    %98 = memref.load %arg2[%c4_51, %c2_52] : memref<10x4xf32, #tpu.memory_space<smem>>
    %99 = vector.broadcast %98 : f32 to vector<8x128xf32>
    %100 = arith.mulf %99, %5 : vector<8x128xf32>
    %101 = arith.addf %97, %100 : vector<8x128xf32>
    %c4_53 = arith.constant 4 : index
    %c3_54 = arith.constant 3 : index
    %102 = memref.load %arg2[%c4_53, %c3_54] : memref<10x4xf32, #tpu.memory_space<smem>>
    %103 = vector.broadcast %102 : f32 to vector<8x128xf32>
    %104 = arith.mulf %103, %7 : vector<8x128xf32>
    %105 = arith.addf %101, %104 : vector<8x128xf32>
    %cst_55 = arith.constant 0.000000e+00 : f32
    %106 = vector.broadcast %cst_55 : f32 to vector<8x128xf32>
    %107 = arith.maximumf %105, %106 : vector<8x128xf32>
    %c5 = arith.constant 5 : index
    %108 = memref.load %arg3[%c5] : memref<10xf32, #tpu.memory_space<smem>>
    %109 = vector.broadcast %108 : f32 to vector<8x128xf32>
    %c5_56 = arith.constant 5 : index
    %c0_57 = arith.constant 0 : index
    %110 = memref.load %arg2[%c5_56, %c0_57] : memref<10x4xf32, #tpu.memory_space<smem>>
    %111 = vector.broadcast %110 : f32 to vector<8x128xf32>
    %112 = arith.mulf %111, %1 : vector<8x128xf32>
    %113 = arith.addf %109, %112 : vector<8x128xf32>
    %c5_58 = arith.constant 5 : index
    %c1_59 = arith.constant 1 : index
    %114 = memref.load %arg2[%c5_58, %c1_59] : memref<10x4xf32, #tpu.memory_space<smem>>
    %115 = vector.broadcast %114 : f32 to vector<8x128xf32>
    %116 = arith.mulf %115, %3 : vector<8x128xf32>
    %117 = arith.addf %113, %116 : vector<8x128xf32>
    %c5_60 = arith.constant 5 : index
    %c2_61 = arith.constant 2 : index
    %118 = memref.load %arg2[%c5_60, %c2_61] : memref<10x4xf32, #tpu.memory_space<smem>>
    %119 = vector.broadcast %118 : f32 to vector<8x128xf32>
    %120 = arith.mulf %119, %5 : vector<8x128xf32>
    %121 = arith.addf %117, %120 : vector<8x128xf32>
    %c5_62 = arith.constant 5 : index
    %c3_63 = arith.constant 3 : index
    %122 = memref.load %arg2[%c5_62, %c3_63] : memref<10x4xf32, #tpu.memory_space<smem>>
    %123 = vector.broadcast %122 : f32 to vector<8x128xf32>
    %124 = arith.mulf %123, %7 : vector<8x128xf32>
    %125 = arith.addf %121, %124 : vector<8x128xf32>
    %cst_64 = arith.constant 0.000000e+00 : f32
    %126 = vector.broadcast %cst_64 : f32 to vector<8x128xf32>
    %127 = arith.maximumf %125, %126 : vector<8x128xf32>
    %c6 = arith.constant 6 : index
    %128 = memref.load %arg3[%c6] : memref<10xf32, #tpu.memory_space<smem>>
    %129 = vector.broadcast %128 : f32 to vector<8x128xf32>
    %c6_65 = arith.constant 6 : index
    %c0_66 = arith.constant 0 : index
    %130 = memref.load %arg2[%c6_65, %c0_66] : memref<10x4xf32, #tpu.memory_space<smem>>
    %131 = vector.broadcast %130 : f32 to vector<8x128xf32>
    %132 = arith.mulf %131, %1 : vector<8x128xf32>
    %133 = arith.addf %129, %132 : vector<8x128xf32>
    %c6_67 = arith.constant 6 : index
    %c1_68 = arith.constant 1 : index
    %134 = memref.load %arg2[%c6_67, %c1_68] : memref<10x4xf32, #tpu.memory_space<smem>>
    %135 = vector.broadcast %134 : f32 to vector<8x128xf32>
    %136 = arith.mulf %135, %3 : vector<8x128xf32>
    %137 = arith.addf %133, %136 : vector<8x128xf32>
    %c6_69 = arith.constant 6 : index
    %c2_70 = arith.constant 2 : index
    %138 = memref.load %arg2[%c6_69, %c2_70] : memref<10x4xf32, #tpu.memory_space<smem>>
    %139 = vector.broadcast %138 : f32 to vector<8x128xf32>
    %140 = arith.mulf %139, %5 : vector<8x128xf32>
    %141 = arith.addf %137, %140 : vector<8x128xf32>
    %c6_71 = arith.constant 6 : index
    %c3_72 = arith.constant 3 : index
    %142 = memref.load %arg2[%c6_71, %c3_72] : memref<10x4xf32, #tpu.memory_space<smem>>
    %143 = vector.broadcast %142 : f32 to vector<8x128xf32>
    %144 = arith.mulf %143, %7 : vector<8x128xf32>
    %145 = arith.addf %141, %144 : vector<8x128xf32>
    %cst_73 = arith.constant 0.000000e+00 : f32
    %146 = vector.broadcast %cst_73 : f32 to vector<8x128xf32>
    %147 = arith.maximumf %145, %146 : vector<8x128xf32>
    %c7 = arith.constant 7 : index
    %148 = memref.load %arg3[%c7] : memref<10xf32, #tpu.memory_space<smem>>
    %149 = vector.broadcast %148 : f32 to vector<8x128xf32>
    %c7_74 = arith.constant 7 : index
    %c0_75 = arith.constant 0 : index
    %150 = memref.load %arg2[%c7_74, %c0_75] : memref<10x4xf32, #tpu.memory_space<smem>>
    %151 = vector.broadcast %150 : f32 to vector<8x128xf32>
    %152 = arith.mulf %151, %1 : vector<8x128xf32>
    %153 = arith.addf %149, %152 : vector<8x128xf32>
    %c7_76 = arith.constant 7 : index
    %c1_77 = arith.constant 1 : index
    %154 = memref.load %arg2[%c7_76, %c1_77] : memref<10x4xf32, #tpu.memory_space<smem>>
    %155 = vector.broadcast %154 : f32 to vector<8x128xf32>
    %156 = arith.mulf %155, %3 : vector<8x128xf32>
    %157 = arith.addf %153, %156 : vector<8x128xf32>
    %c7_78 = arith.constant 7 : index
    %c2_79 = arith.constant 2 : index
    %158 = memref.load %arg2[%c7_78, %c2_79] : memref<10x4xf32, #tpu.memory_space<smem>>
    %159 = vector.broadcast %158 : f32 to vector<8x128xf32>
    %160 = arith.mulf %159, %5 : vector<8x128xf32>
    %161 = arith.addf %157, %160 : vector<8x128xf32>
    %c7_80 = arith.constant 7 : index
    %c3_81 = arith.constant 3 : index
    %162 = memref.load %arg2[%c7_80, %c3_81] : memref<10x4xf32, #tpu.memory_space<smem>>
    %163 = vector.broadcast %162 : f32 to vector<8x128xf32>
    %164 = arith.mulf %163, %7 : vector<8x128xf32>
    %165 = arith.addf %161, %164 : vector<8x128xf32>
    %cst_82 = arith.constant 0.000000e+00 : f32
    %166 = vector.broadcast %cst_82 : f32 to vector<8x128xf32>
    %167 = arith.maximumf %165, %166 : vector<8x128xf32>
    %c8 = arith.constant 8 : index
    %168 = memref.load %arg3[%c8] : memref<10xf32, #tpu.memory_space<smem>>
    %169 = vector.broadcast %168 : f32 to vector<8x128xf32>
    %c8_83 = arith.constant 8 : index
    %c0_84 = arith.constant 0 : index
    %170 = memref.load %arg2[%c8_83, %c0_84] : memref<10x4xf32, #tpu.memory_space<smem>>
    %171 = vector.broadcast %170 : f32 to vector<8x128xf32>
    %172 = arith.mulf %171, %1 : vector<8x128xf32>
    %173 = arith.addf %169, %172 : vector<8x128xf32>
    %c8_85 = arith.constant 8 : index
    %c1_86 = arith.constant 1 : index
    %174 = memref.load %arg2[%c8_85, %c1_86] : memref<10x4xf32, #tpu.memory_space<smem>>
    %175 = vector.broadcast %174 : f32 to vector<8x128xf32>
    %176 = arith.mulf %175, %3 : vector<8x128xf32>
    %177 = arith.addf %173, %176 : vector<8x128xf32>
    %c8_87 = arith.constant 8 : index
    %c2_88 = arith.constant 2 : index
    %178 = memref.load %arg2[%c8_87, %c2_88] : memref<10x4xf32, #tpu.memory_space<smem>>
    %179 = vector.broadcast %178 : f32 to vector<8x128xf32>
    %180 = arith.mulf %179, %5 : vector<8x128xf32>
    %181 = arith.addf %177, %180 : vector<8x128xf32>
    %c8_89 = arith.constant 8 : index
    %c3_90 = arith.constant 3 : index
    %182 = memref.load %arg2[%c8_89, %c3_90] : memref<10x4xf32, #tpu.memory_space<smem>>
    %183 = vector.broadcast %182 : f32 to vector<8x128xf32>
    %184 = arith.mulf %183, %7 : vector<8x128xf32>
    %185 = arith.addf %181, %184 : vector<8x128xf32>
    %cst_91 = arith.constant 0.000000e+00 : f32
    %186 = vector.broadcast %cst_91 : f32 to vector<8x128xf32>
    %187 = arith.maximumf %185, %186 : vector<8x128xf32>
    %c9 = arith.constant 9 : index
    %188 = memref.load %arg3[%c9] : memref<10xf32, #tpu.memory_space<smem>>
    %189 = vector.broadcast %188 : f32 to vector<8x128xf32>
    %c9_92 = arith.constant 9 : index
    %c0_93 = arith.constant 0 : index
    %190 = memref.load %arg2[%c9_92, %c0_93] : memref<10x4xf32, #tpu.memory_space<smem>>
    %191 = vector.broadcast %190 : f32 to vector<8x128xf32>
    %192 = arith.mulf %191, %1 : vector<8x128xf32>
    %193 = arith.addf %189, %192 : vector<8x128xf32>
    %c9_94 = arith.constant 9 : index
    %c1_95 = arith.constant 1 : index
    %194 = memref.load %arg2[%c9_94, %c1_95] : memref<10x4xf32, #tpu.memory_space<smem>>
    %195 = vector.broadcast %194 : f32 to vector<8x128xf32>
    %196 = arith.mulf %195, %3 : vector<8x128xf32>
    %197 = arith.addf %193, %196 : vector<8x128xf32>
    %c9_96 = arith.constant 9 : index
    %c2_97 = arith.constant 2 : index
    %198 = memref.load %arg2[%c9_96, %c2_97] : memref<10x4xf32, #tpu.memory_space<smem>>
    %199 = vector.broadcast %198 : f32 to vector<8x128xf32>
    %200 = arith.mulf %199, %5 : vector<8x128xf32>
    %201 = arith.addf %197, %200 : vector<8x128xf32>
    %c9_98 = arith.constant 9 : index
    %c3_99 = arith.constant 3 : index
    %202 = memref.load %arg2[%c9_98, %c3_99] : memref<10x4xf32, #tpu.memory_space<smem>>
    %203 = vector.broadcast %202 : f32 to vector<8x128xf32>
    %204 = arith.mulf %203, %7 : vector<8x128xf32>
    %205 = arith.addf %201, %204 : vector<8x128xf32>
    %cst_100 = arith.constant 0.000000e+00 : f32
    %206 = vector.broadcast %cst_100 : f32 to vector<8x128xf32>
    %207 = arith.maximumf %205, %206 : vector<8x128xf32>
    %c0_101 = arith.constant 0 : index
    %208 = memref.load %arg5[%c0_101] : memref<3xf32, #tpu.memory_space<smem>>
    %209 = vector.broadcast %208 : f32 to vector<8x128xf32>
    %c0_102 = arith.constant 0 : index
    %c0_103 = arith.constant 0 : index
    %210 = memref.load %arg4[%c0_102, %c0_103] : memref<3x10xf32, #tpu.memory_space<smem>>
    %211 = vector.broadcast %210 : f32 to vector<8x128xf32>
    %212 = arith.mulf %211, %27 : vector<8x128xf32>
    %213 = arith.addf %209, %212 : vector<8x128xf32>
    %c0_104 = arith.constant 0 : index
    %c1_105 = arith.constant 1 : index
    %214 = memref.load %arg4[%c0_104, %c1_105] : memref<3x10xf32, #tpu.memory_space<smem>>
    %215 = vector.broadcast %214 : f32 to vector<8x128xf32>
    %216 = arith.mulf %215, %47 : vector<8x128xf32>
    %217 = arith.addf %213, %216 : vector<8x128xf32>
    %c0_106 = arith.constant 0 : index
    %c2_107 = arith.constant 2 : index
    %218 = memref.load %arg4[%c0_106, %c2_107] : memref<3x10xf32, #tpu.memory_space<smem>>
    %219 = vector.broadcast %218 : f32 to vector<8x128xf32>
    %220 = arith.mulf %219, %67 : vector<8x128xf32>
    %221 = arith.addf %217, %220 : vector<8x128xf32>
    %c0_108 = arith.constant 0 : index
    %c3_109 = arith.constant 3 : index
    %222 = memref.load %arg4[%c0_108, %c3_109] : memref<3x10xf32, #tpu.memory_space<smem>>
    %223 = vector.broadcast %222 : f32 to vector<8x128xf32>
    %224 = arith.mulf %223, %87 : vector<8x128xf32>
    %225 = arith.addf %221, %224 : vector<8x128xf32>
    %c0_110 = arith.constant 0 : index
    %c4_111 = arith.constant 4 : index
    %226 = memref.load %arg4[%c0_110, %c4_111] : memref<3x10xf32, #tpu.memory_space<smem>>
    %227 = vector.broadcast %226 : f32 to vector<8x128xf32>
    %228 = arith.mulf %227, %107 : vector<8x128xf32>
    %229 = arith.addf %225, %228 : vector<8x128xf32>
    %c0_112 = arith.constant 0 : index
    %c5_113 = arith.constant 5 : index
    %230 = memref.load %arg4[%c0_112, %c5_113] : memref<3x10xf32, #tpu.memory_space<smem>>
    %231 = vector.broadcast %230 : f32 to vector<8x128xf32>
    %232 = arith.mulf %231, %127 : vector<8x128xf32>
    %233 = arith.addf %229, %232 : vector<8x128xf32>
    %c0_114 = arith.constant 0 : index
    %c6_115 = arith.constant 6 : index
    %234 = memref.load %arg4[%c0_114, %c6_115] : memref<3x10xf32, #tpu.memory_space<smem>>
    %235 = vector.broadcast %234 : f32 to vector<8x128xf32>
    %236 = arith.mulf %235, %147 : vector<8x128xf32>
    %237 = arith.addf %233, %236 : vector<8x128xf32>
    %c0_116 = arith.constant 0 : index
    %c7_117 = arith.constant 7 : index
    %238 = memref.load %arg4[%c0_116, %c7_117] : memref<3x10xf32, #tpu.memory_space<smem>>
    %239 = vector.broadcast %238 : f32 to vector<8x128xf32>
    %240 = arith.mulf %239, %167 : vector<8x128xf32>
    %241 = arith.addf %237, %240 : vector<8x128xf32>
    %c0_118 = arith.constant 0 : index
    %c8_119 = arith.constant 8 : index
    %242 = memref.load %arg4[%c0_118, %c8_119] : memref<3x10xf32, #tpu.memory_space<smem>>
    %243 = vector.broadcast %242 : f32 to vector<8x128xf32>
    %244 = arith.mulf %243, %187 : vector<8x128xf32>
    %245 = arith.addf %241, %244 : vector<8x128xf32>
    %c0_120 = arith.constant 0 : index
    %c9_121 = arith.constant 9 : index
    %246 = memref.load %arg4[%c0_120, %c9_121] : memref<3x10xf32, #tpu.memory_space<smem>>
    %247 = vector.broadcast %246 : f32 to vector<8x128xf32>
    %248 = arith.mulf %247, %207 : vector<8x128xf32>
    %249 = arith.addf %245, %248 : vector<8x128xf32>
    %c1_122 = arith.constant 1 : index
    %250 = memref.load %arg5[%c1_122] : memref<3xf32, #tpu.memory_space<smem>>
    %251 = vector.broadcast %250 : f32 to vector<8x128xf32>
    %c1_123 = arith.constant 1 : index
    %c0_124 = arith.constant 0 : index
    %252 = memref.load %arg4[%c1_123, %c0_124] : memref<3x10xf32, #tpu.memory_space<smem>>
    %253 = vector.broadcast %252 : f32 to vector<8x128xf32>
    %254 = arith.mulf %253, %27 : vector<8x128xf32>
    %255 = arith.addf %251, %254 : vector<8x128xf32>
    %c1_125 = arith.constant 1 : index
    %c1_126 = arith.constant 1 : index
    %256 = memref.load %arg4[%c1_125, %c1_126] : memref<3x10xf32, #tpu.memory_space<smem>>
    %257 = vector.broadcast %256 : f32 to vector<8x128xf32>
    %258 = arith.mulf %257, %47 : vector<8x128xf32>
    %259 = arith.addf %255, %258 : vector<8x128xf32>
    %c1_127 = arith.constant 1 : index
    %c2_128 = arith.constant 2 : index
    %260 = memref.load %arg4[%c1_127, %c2_128] : memref<3x10xf32, #tpu.memory_space<smem>>
    %261 = vector.broadcast %260 : f32 to vector<8x128xf32>
    %262 = arith.mulf %261, %67 : vector<8x128xf32>
    %263 = arith.addf %259, %262 : vector<8x128xf32>
    %c1_129 = arith.constant 1 : index
    %c3_130 = arith.constant 3 : index
    %264 = memref.load %arg4[%c1_129, %c3_130] : memref<3x10xf32, #tpu.memory_space<smem>>
    %265 = vector.broadcast %264 : f32 to vector<8x128xf32>
    %266 = arith.mulf %265, %87 : vector<8x128xf32>
    %267 = arith.addf %263, %266 : vector<8x128xf32>
    %c1_131 = arith.constant 1 : index
    %c4_132 = arith.constant 4 : index
    %268 = memref.load %arg4[%c1_131, %c4_132] : memref<3x10xf32, #tpu.memory_space<smem>>
    %269 = vector.broadcast %268 : f32 to vector<8x128xf32>
    %270 = arith.mulf %269, %107 : vector<8x128xf32>
    %271 = arith.addf %267, %270 : vector<8x128xf32>
    %c1_133 = arith.constant 1 : index
    %c5_134 = arith.constant 5 : index
    %272 = memref.load %arg4[%c1_133, %c5_134] : memref<3x10xf32, #tpu.memory_space<smem>>
    %273 = vector.broadcast %272 : f32 to vector<8x128xf32>
    %274 = arith.mulf %273, %127 : vector<8x128xf32>
    %275 = arith.addf %271, %274 : vector<8x128xf32>
    %c1_135 = arith.constant 1 : index
    %c6_136 = arith.constant 6 : index
    %276 = memref.load %arg4[%c1_135, %c6_136] : memref<3x10xf32, #tpu.memory_space<smem>>
    %277 = vector.broadcast %276 : f32 to vector<8x128xf32>
    %278 = arith.mulf %277, %147 : vector<8x128xf32>
    %279 = arith.addf %275, %278 : vector<8x128xf32>
    %c1_137 = arith.constant 1 : index
    %c7_138 = arith.constant 7 : index
    %280 = memref.load %arg4[%c1_137, %c7_138] : memref<3x10xf32, #tpu.memory_space<smem>>
    %281 = vector.broadcast %280 : f32 to vector<8x128xf32>
    %282 = arith.mulf %281, %167 : vector<8x128xf32>
    %283 = arith.addf %279, %282 : vector<8x128xf32>
    %c1_139 = arith.constant 1 : index
    %c8_140 = arith.constant 8 : index
    %284 = memref.load %arg4[%c1_139, %c8_140] : memref<3x10xf32, #tpu.memory_space<smem>>
    %285 = vector.broadcast %284 : f32 to vector<8x128xf32>
    %286 = arith.mulf %285, %187 : vector<8x128xf32>
    %287 = arith.addf %283, %286 : vector<8x128xf32>
    %c1_141 = arith.constant 1 : index
    %c9_142 = arith.constant 9 : index
    %288 = memref.load %arg4[%c1_141, %c9_142] : memref<3x10xf32, #tpu.memory_space<smem>>
    %289 = vector.broadcast %288 : f32 to vector<8x128xf32>
    %290 = arith.mulf %289, %207 : vector<8x128xf32>
    %291 = arith.addf %287, %290 : vector<8x128xf32>
    %c2_143 = arith.constant 2 : index
    %292 = memref.load %arg5[%c2_143] : memref<3xf32, #tpu.memory_space<smem>>
    %293 = vector.broadcast %292 : f32 to vector<8x128xf32>
    %c2_144 = arith.constant 2 : index
    %c0_145 = arith.constant 0 : index
    %294 = memref.load %arg4[%c2_144, %c0_145] : memref<3x10xf32, #tpu.memory_space<smem>>
    %295 = vector.broadcast %294 : f32 to vector<8x128xf32>
    %296 = arith.mulf %295, %27 : vector<8x128xf32>
    %297 = arith.addf %293, %296 : vector<8x128xf32>
    %c2_146 = arith.constant 2 : index
    %c1_147 = arith.constant 1 : index
    %298 = memref.load %arg4[%c2_146, %c1_147] : memref<3x10xf32, #tpu.memory_space<smem>>
    %299 = vector.broadcast %298 : f32 to vector<8x128xf32>
    %300 = arith.mulf %299, %47 : vector<8x128xf32>
    %301 = arith.addf %297, %300 : vector<8x128xf32>
    %c2_148 = arith.constant 2 : index
    %c2_149 = arith.constant 2 : index
    %302 = memref.load %arg4[%c2_148, %c2_149] : memref<3x10xf32, #tpu.memory_space<smem>>
    %303 = vector.broadcast %302 : f32 to vector<8x128xf32>
    %304 = arith.mulf %303, %67 : vector<8x128xf32>
    %305 = arith.addf %301, %304 : vector<8x128xf32>
    %c2_150 = arith.constant 2 : index
    %c3_151 = arith.constant 3 : index
    %306 = memref.load %arg4[%c2_150, %c3_151] : memref<3x10xf32, #tpu.memory_space<smem>>
    %307 = vector.broadcast %306 : f32 to vector<8x128xf32>
    %308 = arith.mulf %307, %87 : vector<8x128xf32>
    %309 = arith.addf %305, %308 : vector<8x128xf32>
    %c2_152 = arith.constant 2 : index
    %c4_153 = arith.constant 4 : index
    %310 = memref.load %arg4[%c2_152, %c4_153] : memref<3x10xf32, #tpu.memory_space<smem>>
    %311 = vector.broadcast %310 : f32 to vector<8x128xf32>
    %312 = arith.mulf %311, %107 : vector<8x128xf32>
    %313 = arith.addf %309, %312 : vector<8x128xf32>
    %c2_154 = arith.constant 2 : index
    %c5_155 = arith.constant 5 : index
    %314 = memref.load %arg4[%c2_154, %c5_155] : memref<3x10xf32, #tpu.memory_space<smem>>
    %315 = vector.broadcast %314 : f32 to vector<8x128xf32>
    %316 = arith.mulf %315, %127 : vector<8x128xf32>
    %317 = arith.addf %313, %316 : vector<8x128xf32>
    %c2_156 = arith.constant 2 : index
    %c6_157 = arith.constant 6 : index
    %318 = memref.load %arg4[%c2_156, %c6_157] : memref<3x10xf32, #tpu.memory_space<smem>>
    %319 = vector.broadcast %318 : f32 to vector<8x128xf32>
    %320 = arith.mulf %319, %147 : vector<8x128xf32>
    %321 = arith.addf %317, %320 : vector<8x128xf32>
    %c2_158 = arith.constant 2 : index
    %c7_159 = arith.constant 7 : index
    %322 = memref.load %arg4[%c2_158, %c7_159] : memref<3x10xf32, #tpu.memory_space<smem>>
    %323 = vector.broadcast %322 : f32 to vector<8x128xf32>
    %324 = arith.mulf %323, %167 : vector<8x128xf32>
    %325 = arith.addf %321, %324 : vector<8x128xf32>
    %c2_160 = arith.constant 2 : index
    %c8_161 = arith.constant 8 : index
    %326 = memref.load %arg4[%c2_160, %c8_161] : memref<3x10xf32, #tpu.memory_space<smem>>
    %327 = vector.broadcast %326 : f32 to vector<8x128xf32>
    %328 = arith.mulf %327, %187 : vector<8x128xf32>
    %329 = arith.addf %325, %328 : vector<8x128xf32>
    %c2_162 = arith.constant 2 : index
    %c9_163 = arith.constant 9 : index
    %330 = memref.load %arg4[%c2_162, %c9_163] : memref<3x10xf32, #tpu.memory_space<smem>>
    %331 = vector.broadcast %330 : f32 to vector<8x128xf32>
    %332 = arith.mulf %331, %207 : vector<8x128xf32>
    %333 = arith.addf %329, %332 : vector<8x128xf32>
    %334 = arith.maximumf %249, %291 : vector<8x128xf32>
    %335 = arith.maximumf %334, %333 : vector<8x128xf32>
    %336 = arith.subf %249, %335 : vector<8x128xf32>
    %337 = math.exp %336 : vector<8x128xf32>
    %338 = arith.subf %291, %335 : vector<8x128xf32>
    %339 = math.exp %338 : vector<8x128xf32>
    %340 = arith.subf %333, %335 : vector<8x128xf32>
    %341 = math.exp %340 : vector<8x128xf32>
    %342 = arith.addf %337, %339 : vector<8x128xf32>
    %343 = arith.addf %342, %341 : vector<8x128xf32>
    %cst_164 = arith.constant 1.000000e+00 : f32
    %344 = vector.broadcast %cst_164 : f32 to vector<8x128xf32>
    %345 = arith.divf %344, %343 : vector<8x128xf32>
    %346 = arith.mulf %337, %345 : vector<8x128xf32>
    %c0_165 = arith.constant 0 : index
    %c0_166 = arith.constant 0 : index
    %c0_167 = arith.constant 0 : index
    %347 = vector.load %arg6[%c0_165, %c0_166, %c0_167] : memref<3x8x128xf32, #tpu.memory_space<vmem>>, vector<1x8x128xf32>
    %348 = vector.shape_cast %347 : vector<1x8x128xf32> to vector<8x128xf32>
    %349 = vector.shape_cast %346 : vector<8x128xf32> to vector<1x8x128xf32>
    tpu.vector_store %arg6[%c0_165, %c0_166, %c0_167], %349 {strides = array<i32>} : memref<3x8x128xf32, #tpu.memory_space<vmem>>, vector<1x8x128xf32>,
    %350 = arith.mulf %339, %345 : vector<8x128xf32>
    %c1_168 = arith.constant 1 : index
    %c0_169 = arith.constant 0 : index
    %c0_170 = arith.constant 0 : index
    %351 = vector.load %arg6[%c1_168, %c0_169, %c0_170] : memref<3x8x128xf32, #tpu.memory_space<vmem>>, vector<1x8x128xf32>
    %352 = vector.shape_cast %351 : vector<1x8x128xf32> to vector<8x128xf32>
    %353 = vector.shape_cast %350 : vector<8x128xf32> to vector<1x8x128xf32>
    tpu.vector_store %arg6[%c1_168, %c0_169, %c0_170], %353 {strides = array<i32>} : memref<3x8x128xf32, #tpu.memory_space<vmem>>, vector<1x8x128xf32>,
    %354 = arith.mulf %341, %345 : vector<8x128xf32>
    %c2_171 = arith.constant 2 : index
    %c0_172 = arith.constant 0 : index
    %c0_173 = arith.constant 0 : index
    %355 = vector.load %arg6[%c2_171, %c0_172, %c0_173] : memref<3x8x128xf32, #tpu.memory_space<vmem>>, vector<1x8x128xf32>
    %356 = vector.shape_cast %355 : vector<1x8x128xf32> to vector<8x128xf32>
    %357 = vector.shape_cast %354 : vector<8x128xf32> to vector<1x8x128xf32>
    tpu.vector_store %arg6[%c2_171, %c0_172, %c0_173], %357 {strides = array<i32>} : memref<3x8x128xf32, #tpu.memory_space<vmem>>, vector<1x8x128xf32>,
    return
  }
  func.func @transform_0(%arg0: i32) -> (i32, i32, i32) {
    %c0_i32 = arith.constant 0 : i32
    %c0_i32_0 = arith.constant 0 : i32
    %c0_i32_1 = arith.constant 0 : i32
    return %c0_i32, %arg0, %c0_i32_0 : i32, i32, i32
  }
  func.func @transform_1(%arg0: i32) -> (i32, i32) {
    %c0_i32 = arith.constant 0 : i32
    %c0_i32_0 = arith.constant 0 : i32
    %c0_i32_1 = arith.constant 0 : i32
    return %c0_i32, %c0_i32_0 : i32, i32
  }
  func.func @transform_2(%arg0: i32) -> i32 {
    %c0_i32 = arith.constant 0 : i32
    %c0_i32_0 = arith.constant 0 : i32
    return %c0_i32 : i32
  }
  func.func @transform_3(%arg0: i32) -> (i32, i32) {
    %c0_i32 = arith.constant 0 : i32
    %c0_i32_0 = arith.constant 0 : i32
    %c0_i32_1 = arith.constant 0 : i32
    return %c0_i32, %c0_i32_0 : i32, i32
  }
  func.func @transform_4(%arg0: i32) -> i32 {
    %c0_i32 = arith.constant 0 : i32
    %c0_i32_0 = arith.constant 0 : i32
    return %c0_i32 : i32
  }
  func.func @transform_5(%arg0: i32) -> (i32, i32, i32) {
    %c0_i32 = arith.constant 0 : i32
    %c0_i32_0 = arith.constant 0 : i32
    %c0_i32_1 = arith.constant 0 : i32
    return %c0_i32, %arg0, %c0_i32_0 : i32, i32, i32
  }
}

</mosaic_0001>

<llo_original>
// kernel: mlp_forward.1
$region0: #{mlp_forward.1}
  #allocation0 [shape = 'u32[]', space=smem, size = 0x4, offset = 0x4, fixed_abs, tag = 'smem constant byte address 0x4 - core index']
  #allocation1 [shape = 'u32[144,128]{1,0:T(1,128)}', space=vmem, size = 0x12000, scoped, tag = 'internal scratch']
  %s0 = inlined_call_operand.vmem [shape: f32[4,8,128], index: 0, kind: input, shape index: {}]
  %s1 = inlined_call_operand.vmem [shape: f32[10,4], index: 1, kind: input, shape index: {}]
  %s2 = inlined_call_operand.vmem [shape: f32[10], index: 2, kind: input, shape index: {}]
  %s3 = inlined_call_operand.vmem [shape: f32[3,10], index: 3, kind: input, shape index: {}]
  %s4 = inlined_call_operand.vmem [shape: f32[3], index: 4, kind: input, shape index: {}]
  %s5 = inlined_call_operand.vmem [shape: f32[3,8,128], index: 5, kind: output, shape index: {}]
  %s6 = sld [smem:[#allocation0]]
  $region46: #{mlp_forward.1} parent=0
    _
  %s8 = ssub.s32 1, %s6
  %s9 = scalar_select 0, %s8, %s6
  $region1: #{mlp_forward.1} parent=0
    #allocation2 [shape = 'u8[8192]{0}', space=smem, size = 0x2000, scoped, tag = 'input window, operand 1, single buffered']
    #allocation3 [shape = 's32[1]{0}', space=sflag, size = 0x4, scoped, tag = 'scoped memory for mlp_forward.1']
    #allocation4 [shape = 'u8[512]{0}', space=smem, size = 0x200, scoped, tag = 'input window, operand 2, single buffered']
    #allocation5 [shape = 's32[1]{0}', space=sflag, size = 0x4, scoped, tag = 'scoped memory for mlp_forward.1']
    #allocation6 [shape = 'u8[2048]{0}', space=smem, size = 0x800, scoped, tag = 'input window, operand 3, single buffered']
    #allocation7 [shape = 'u8[512]{0}', space=smem, size = 0x200, scoped, tag = 'input window, operand 4, single buffered']
    #allocation8 [shape = 's32[1]{0}', space=sflag, size = 0x4, scoped, tag = 'scoped memory for mlp_forward.1']
    %10 = vsyncpa [#allocation3], 0
    %11 = vsyncpa [#allocation5], 0
    %12 = vsyncpa [#allocation8], 0
    // Predicated region
    $region2: #{mlp_forward.1} parent=1 // pred_check
      _
    $region3: #{mlp_forward.1} parent=1 // pred_check_branch
      %14 = sbr.rel (0) target = $region5
    $region4: #{mlp_forward.1} parent=1 // pred_region
      _
    $region5: #{mlp_forward.1} parent=1 // pred_fallthru
      _
    // Predicated region
    $region6: #{mlp_forward.1} parent=1 // pred_check
      _
    $region7: #{mlp_forward.1} parent=1 // pred_check_branch
      %16 = sbr.rel (0) target = $region9
    $region8: #{mlp_forward.1} parent=1 // pred_region
      %s18 = ssub.s32 256, 256
      %19 = vsyncadd [#allocation3], %s18
      %s20 = sshll.u32 %s1, 4
      %s21 = int_to_ptr.vmem [resolvable:$true] %s20
      %26 = dma.vmem_to_smem %s21, 256, [#allocation2], [#allocation3], 128, 128, 8
    $region9: #{mlp_forward.1} parent=1 // pred_fallthru
      _
    // Predicated region
    $region10: #{mlp_forward.1} parent=1 // pred_check
      _
    $region11: #{mlp_forward.1} parent=1 // pred_check_branch
      %28 = sbr.rel (0) target = $region13
    $region12: #{mlp_forward.1} parent=1 // pred_region
      %s30 = ssub.s32 16, 16
      %31 = vsyncadd [#allocation5], %s30
      %s33 = sshll.u32 %s2, 4
      %s34 = int_to_ptr.vmem [resolvable:$true] %s33
      %36 = dma.vmem_to_smem %s34, 16, [#allocation4], [#allocation5]
    $region13: #{mlp_forward.1} parent=1 // pred_fallthru
      _
    // Predicated region
    $region14: #{mlp_forward.1} parent=1 // pred_check
      _
    $region15: #{mlp_forward.1} parent=1 // pred_check_branch
      %38 = sbr.rel (0) target = $region17
    $region16: #{mlp_forward.1} parent=1 // pred_region
      %s40 = ssub.s32 64, 64
      %41 = vsyncadd [#allocation5], %s40
      %s43 = sshll.u32 %s3, 4
      %s44 = int_to_ptr.vmem [resolvable:$true] %s43
      %46 = dma.vmem_to_smem %s44, 64, [#allocation6], [#allocation5]
    $region17: #{mlp_forward.1} parent=1 // pred_fallthru
      _
    // Predicated region
    $region18: #{mlp_forward.1} parent=1 // pred_check
      _
    $region19: #{mlp_forward.1} parent=1 // pred_check_branch
      %48 = sbr.rel (0) target = $region21
    $region20: #{mlp_forward.1} parent=1 // pred_region
      %s50 = ssub.s32 16, 16
      %51 = vsyncadd [#allocation8], %s50
      %s53 = sshll.u32 %s4, 4
      %s54 = int_to_ptr.vmem [resolvable:$true] %s53
      %56 = dma.vmem_to_smem %s54, 16, [#allocation7], [#allocation8]
    $region21: #{mlp_forward.1} parent=1 // pred_fallthru
      _
    // Predicated region
    $region22: #{mlp_forward.1} parent=1 // pred_check
      _
    $region23: #{mlp_forward.1} parent=1 // pred_check_branch
      %58 = sbr.rel (0) target = $region25
    $region24: #{mlp_forward.1} parent=1 // pred_region
      %59 = dma.done [#allocation3], 256
    $region25: #{mlp_forward.1} parent=1 // pred_fallthru
      _
    // Predicated region
    $region26: #{mlp_forward.1} parent=1 // pred_check
      _
    $region27: #{mlp_forward.1} parent=1 // pred_check_branch
      %61 = sbr.rel (0) target = $region29
    $region28: #{mlp_forward.1} parent=1 // pred_region
      %62 = dma.done [#allocation5], 16
    $region29: #{mlp_forward.1} parent=1 // pred_fallthru
      _
    // Predicated region
    $region30: #{mlp_forward.1} parent=1 // pred_check
      _
    $region31: #{mlp_forward.1} parent=1 // pred_check_branch
      %64 = sbr.rel (0) target = $region33
    $region32: #{mlp_forward.1} parent=1 // pred_region
      %65 = dma.done [#allocation5], 64
    $region33: #{mlp_forward.1} parent=1 // pred_fallthru
      _
    // Predicated region
    $region34: #{mlp_forward.1} parent=1 // pred_check
      _
    $region35: #{mlp_forward.1} parent=1 // pred_check_branch
      %67 = sbr.rel (0) target = $region37
    $region36: #{mlp_forward.1} parent=1 // pred_region
      %68 = dma.done [#allocation8], 16
    $region37: #{mlp_forward.1} parent=1 // pred_fallthru
      _
    %69 = sfence
    %v70 = vld [vmem:[%s0] sm:$0xff]
    %s71 = scalar_lea.vmem %s0, 8
    %v72 = vld [vmem:[%s71] sm:$0xff]
    %s73 = scalar_lea.vmem %s0, 16
    %v74 = vld [vmem:[%s73] sm:$0xff]
    %s75 = scalar_lea.vmem %s0, 24
    %v76 = vld [vmem:[%s75] sm:$0xff]
    %s77 = sld [smem:[#allocation4]]
    %v78 = vstv %s77
    %s79 = sld [smem:[#allocation2]]
    %v80 = vstv %s79
    %v81 = vmul.f32 %v80, %v70
    %v82 = vadd.f32 %v78, %v81
    %s83 = sld [smem:[#allocation2 + $0x1]]
    %v84 = vstv %s83
    %v85 = vmul.f32 %v84, %v72
    %v86 = vadd.f32 %v82, %v85
    %s87 = sld [smem:[#allocation2 + $0x2]]
    %v88 = vstv %s87
    %v89 = vmul.f32 %v88, %v74
    %v90 = vadd.f32 %v86, %v89
    %s91 = sld [smem:[#allocation2 + $0x3]]
    %v92 = vstv %s91
    %v93 = vmul.f32 %v92, %v76
    %v94 = vadd.f32 %v90, %v93
    %v95 = vmax.f32 %v94, 0.0
    %s96 = sld [smem:[#allocation4 + $0x1]]
    %v97 = vstv %s96
    %s98 = sld [smem:[#allocation2 + $0x80]]
    %v99 = vstv %s98
    %v100 = vmul.f32 %v99, %v70
    %v101 = vadd.f32 %v97, %v100
    %s102 = sld [smem:[#allocation2 + $0x81]]
    %v103 = vstv %s102
    %v104 = vmul.f32 %v103, %v72
    %v105 = vadd.f32 %v101, %v104
    %s106 = sld [smem:[#allocation2 + $0x82]]
    %v107 = vstv %s106
    %v108 = vmul.f32 %v107, %v74
    %v109 = vadd.f32 %v105, %v108
    %s110 = sld [smem:[#allocation2 + $0x83]]
    %v111 = vstv %s110
    %v112 = vmul.f32 %v111, %v76
    %v113 = vadd.f32 %v109, %v112
    %v114 = vmax.f32 %v113, 0.0
    %s115 = sld [smem:[#allocation4 + $0x2]]
    %v116 = vstv %s115
    %s117 = sld [smem:[#allocation2 + $0x100]]
    %v118 = vstv %s117
    %v119 = vmul.f32 %v118, %v70
    %v120 = vadd.f32 %v116, %v119
    %s121 = sld [smem:[#allocation2 + $0x101]]
    %v122 = vstv %s121
    %v123 = vmul.f32 %v122, %v72
    %v124 = vadd.f32 %v120, %v123
    %s125 = sld [smem:[#allocation2 + $0x102]]
    %v126 = vstv %s125
    %v127 = vmul.f32 %v126, %v74
    %v128 = vadd.f32 %v124, %v127
    %s129 = sld [smem:[#allocation2 + $0x103]]
    %v130 = vstv %s129
    %v131 = vmul.f32 %v130, %v76
    %v132 = vadd.f32 %v128, %v131
    %v133 = vmax.f32 %v132, 0.0
    %s134 = sld [smem:[#allocation4 + $0x3]]
    %v135 = vstv %s134
    %s136 = sld [smem:[#allocation2 + $0x180]]
    %v137 = vstv %s136
    %v138 = vmul.f32 %v137, %v70
    %v139 = vadd.f32 %v135, %v138
    %s140 = sld [smem:[#allocation2 + $0x181]]
    %v141 = vstv %s140
    %v142 = vmul.f32 %v141, %v72
    %v143 = vadd.f32 %v139, %v142
    %s144 = sld [smem:[#allocation2 + $0x182]]
    %v145 = vstv %s144
    %v146 = vmul.f32 %v145, %v74
    %v147 = vadd.f32 %v143, %v146
    %s148 = sld [smem:[#allocation2 + $0x183]]
    %v149 = vstv %s148
    %v150 = vmul.f32 %v149, %v76
    %v151 = vadd.f32 %v147, %v150
    %v152 = vmax.f32 %v151, 0.0
    %s153 = sld [smem:[#allocation4 + $0x4]]
    %v154 = vstv %s153
    %s155 = sld [smem:[#allocation2 + $0x200]]
    %v156 = vstv %s155
    %v157 = vmul.f32 %v156, %v70
    %v158 = vadd.f32 %v154, %v157
    %s159 = sld [smem:[#allocation2 + $0x201]]
    %v160 = vstv %s159
    %v161 = vmul.f32 %v160, %v72
    %v162 = vadd.f32 %v158, %v161
    %s163 = sld [smem:[#allocation2 + $0x202]]
    %v164 = vstv %s163
    %v165 = vmul.f32 %v164, %v74
    %v166 = vadd.f32 %v162, %v165
    %s167 = sld [smem:[#allocation2 + $0x203]]
    %v168 = vstv %s167
    %v169 = vmul.f32 %v168, %v76
    %v170 = vadd.f32 %v166, %v169
    %v171 = vmax.f32 %v170, 0.0
    %s172 = sld [smem:[#allocation4 + $0x5]]
    %v173 = vstv %s172
    %s174 = sld [smem:[#allocation2 + $0x280]]
    %v175 = vstv %s174
    %v176 = vmul.f32 %v175, %v70
    %v177 = vadd.f32 %v173, %v176
    %s178 = sld [smem:[#allocation2 + $0x281]]
    %v179 = vstv %s178
    %v180 = vmul.f32 %v179, %v72
    %v181 = vadd.f32 %v177, %v180
    %s182 = sld [smem:[#allocation2 + $0x282]]
    %v183 = vstv %s182
    %v184 = vmul.f32 %v183, %v74
    %v185 = vadd.f32 %v181, %v184
    %s186 = sld [smem:[#allocation2 + $0x283]]
    %v187 = vstv %s186
    %v188 = vmul.f32 %v187, %v76
    %v189 = vadd.f32 %v185, %v188
    %v190 = vmax.f32 %v189, 0.0
    %s191 = sld [smem:[#allocation4 + $0x6]]
    %v192 = vstv %s191
    %s193 = sld [smem:[#allocation2 + $0x300]]
    %v194 = vstv %s193
    %v195 = vmul.f32 %v194, %v70
    %v196 = vadd.f32 %v192, %v195
    %s197 = sld [smem:[#allocation2 + $0x301]]
    %v198 = vstv %s197
    %v199 = vmul.f32 %v198, %v72
    %v200 = vadd.f32 %v196, %v199
    %s201 = sld [smem:[#allocation2 + $0x302]]
    %v202 = vstv %s201
    %v203 = vmul.f32 %v202, %v74
    %v204 = vadd.f32 %v200, %v203
    %s205 = sld [smem:[#allocation2 + $0x303]]
    %v206 = vstv %s205
    %v207 = vmul.f32 %v206, %v76
    %v208 = vadd.f32 %v204, %v207
    %v209 = vmax.f32 %v208, 0.0
    %s210 = sld [smem:[#allocation4 + $0x7]]
    %v211 = vstv %s210
    %s212 = sld [smem:[#allocation2 + $0x380]]
    %v213 = vstv %s212
    %v214 = vmul.f32 %v213, %v70
    %v215 = vadd.f32 %v211, %v214
    %s216 = sld [smem:[#allocation2 + $0x381]]
    %v217 = vstv %s216
    %v218 = vmul.f32 %v217, %v72
    %v219 = vadd.f32 %v215, %v218
    %s220 = sld [smem:[#allocation2 + $0x382]]
    %v221 = vstv %s220
    %v222 = vmul.f32 %v221, %v74
    %v223 = vadd.f32 %v219, %v222
    %s224 = sld [smem:[#allocation2 + $0x383]]
    %v225 = vstv %s224
    %v226 = vmul.f32 %v225, %v76
    %v227 = vadd.f32 %v223, %v226
    %v228 = vmax.f32 %v227, 0.0
    %s229 = sld [smem:[#allocation4 + $0x8]]
    %v230 = vstv %s229
    %s231 = sld [smem:[#allocation2 + $0x400]]
    %v232 = vstv %s231
    %v233 = vmul.f32 %v232, %v70
    %v234 = vadd.f32 %v230, %v233
    %s235 = sld [smem:[#allocation2 + $0x401]]
    %v236 = vstv %s235
    %v237 = vmul.f32 %v236, %v72
    %v238 = vadd.f32 %v234, %v237
    %s239 = sld [smem:[#allocation2 + $0x402]]
    %v240 = vstv %s239
    %v241 = vmul.f32 %v240, %v74
    %v242 = vadd.f32 %v238, %v241
    %s243 = sld [smem:[#allocation2 + $0x403]]
    %v244 = vstv %s243
    %v245 = vmul.f32 %v244, %v76
    %v246 = vadd.f32 %v242, %v245
    %v247 = vmax.f32 %v246, 0.0
    %s248 = sld [smem:[#allocation4 + $0x9]]
    %v249 = vstv %s248
    %s250 = sld [smem:[#allocation2 + $0x480]]
    %v251 = vstv %s250
    %v252 = vmul.f32 %v251, %v70
    %v253 = vadd.f32 %v249, %v252
    %s254 = sld [smem:[#allocation2 + $0x481]]
    %v255 = vstv %s254
    %v256 = vmul.f32 %v255, %v72
    %v257 = vadd.f32 %v253, %v256
    %s258 = sld [smem:[#allocation2 + $0x482]]
    %v259 = vstv %s258
    %v260 = vmul.f32 %v259, %v74
    %v261 = vadd.f32 %v257, %v260
    %s262 = sld [smem:[#allocation2 + $0x483]]
    %v263 = vstv %s262
    %v264 = vmul.f32 %v263, %v76
    %v265 = vadd.f32 %v261, %v264
    %v266 = vmax.f32 %v265, 0.0
    %s267 = sld [smem:[#allocation7]]
    %v268 = vstv %s267
    %s269 = sld [smem:[#allocation6]]
    %v270 = vstv %s269
    %v271 = vmul.f32 %v270, %v95
    %v272 = vadd.f32 %v268, %v271
    %s273 = sld [smem:[#allocation6 + $0x1]]
    %v274 = vstv %s273
    %v275 = vmul.f32 %v274, %v114
    %v276 = vadd.f32 %v272, %v275
    %s277 = sld [smem:[#allocation6 + $0x2]]
    %v278 = vstv %s277
    %v279 = vmul.f32 %v278, %v133
    %v280 = vadd.f32 %v276, %v279
    %s281 = sld [smem:[#allocation6 + $0x3]]
    %v282 = vstv %s281
    %v283 = vmul.f32 %v282, %v152
    %v284 = vadd.f32 %v280, %v283
    %s285 = sld [smem:[#allocation6 + $0x4]]
    %v286 = vstv %s285
    %v287 = vmul.f32 %v286, %v171
    %v288 = vadd.f32 %v284, %v287
    %s289 = sld [smem:[#allocation6 + $0x5]]
    %v290 = vstv %s289
    %v291 = vmul.f32 %v290, %v190
    %v292 = vadd.f32 %v288, %v291
    %s293 = sld [smem:[#allocation6 + $0x6]]
    %v294 = vstv %s293
    %v295 = vmul.f32 %v294, %v209
    %v296 = vadd.f32 %v292, %v295
    %s297 = sld [smem:[#allocation6 + $0x7]]
    %v298 = vstv %s297
    %v299 = vmul.f32 %v298, %v228
    %v300 = vadd.f32 %v296, %v299
    %s301 = sld [smem:[#allocation6 + $0x8]]
    %v302 = vstv %s301
    %v303 = vmul.f32 %v302, %v247
    %v304 = vadd.f32 %v300, %v303
    %s305 = sld [smem:[#allocation6 + $0x9]]
    %v306 = vstv %s305
    %v307 = vmul.f32 %v306, %v266
    %v308 = vadd.f32 %v304, %v307
    %s309 = sld [smem:[#allocation7 + $0x1]]
    %v310 = vstv %s309
    %s311 = sld [smem:[#allocation6 + $0x80]]
    %v312 = vstv %s311
    %v313 = vmul.f32 %v312, %v95
    %v314 = vadd.f32 %v310, %v313
    %s315 = sld [smem:[#allocation6 + $0x81]]
    %v316 = vstv %s315
    %v317 = vmul.f32 %v316, %v114
    %v318 = vadd.f32 %v314, %v317
    %s319 = sld [smem:[#allocation6 + $0x82]]
    %v320 = vstv %s319
    %v321 = vmul.f32 %v320, %v133
    %v322 = vadd.f32 %v318, %v321
    %s323 = sld [smem:[#allocation6 + $0x83]]
    %v324 = vstv %s323
    %v325 = vmul.f32 %v324, %v152
    %v326 = vadd.f32 %v322, %v325
    %s327 = sld [smem:[#allocation6 + $0x84]]
    %v328 = vstv %s327
    %v329 = vmul.f32 %v328, %v171
    %v330 = vadd.f32 %v326, %v329
    %s331 = sld [smem:[#allocation6 + $0x85]]
    %v332 = vstv %s331
    %v333 = vmul.f32 %v332, %v190
    %v334 = vadd.f32 %v330, %v333
    %s335 = sld [smem:[#allocation6 + $0x86]]
    %v336 = vstv %s335
    %v337 = vmul.f32 %v336, %v209
    %v338 = vadd.f32 %v334, %v337
    %s339 = sld [smem:[#allocation6 + $0x87]]
    %v340 = vstv %s339
    %v341 = vmul.f32 %v340, %v228
    %v342 = vadd.f32 %v338, %v341
    %s343 = sld [smem:[#allocation6 + $0x88]]
    %v344 = vstv %s343
    %v345 = vmul.f32 %v344, %v247
    %v346 = vadd.f32 %v342, %v345
    %s347 = sld [smem:[#allocation6 + $0x89]]
    %v348 = vstv %s347
    %v349 = vmul.f32 %v348, %v266
    %v350 = vadd.f32 %v346, %v349
    %s351 = sld [smem:[#allocation7 + $0x2]]
    %v352 = vstv %s351
    %s353 = sld [smem:[#allocation6 + $0x100]]
    %v354 = vstv %s353
    %v355 = vmul.f32 %v354, %v95
    %v356 = vadd.f32 %v352, %v355
    %s357 = sld [smem:[#allocation6 + $0x101]]
    %v358 = vstv %s357
    %v359 = vmul.f32 %v358, %v114
    %v360 = vadd.f32 %v356, %v359
    %s361 = sld [smem:[#allocation6 + $0x102]]
    %v362 = vstv %s361
    %v363 = vmul.f32 %v362, %v133
    %v364 = vadd.f32 %v360, %v363
    %s365 = sld [smem:[#allocation6 + $0x103]]
    %v366 = vstv %s365
    %v367 = vmul.f32 %v366, %v152
    %v368 = vadd.f32 %v364, %v367
    %s369 = sld [smem:[#allocation6 + $0x104]]
    %v370 = vstv %s369
    %v371 = vmul.f32 %v370, %v171
    %v372 = vadd.f32 %v368, %v371
    %s373 = sld [smem:[#allocation6 + $0x105]]
    %v374 = vstv %s373
    %v375 = vmul.f32 %v374, %v190
    %v376 = vadd.f32 %v372, %v375
    %s377 = sld [smem:[#allocation6 + $0x106]]
    %v378 = vstv %s377
    %v379 = vmul.f32 %v378, %v209
    %v380 = vadd.f32 %v376, %v379
    %s381 = sld [smem:[#allocation6 + $0x107]]
    %v382 = vstv %s381
    %v383 = vmul.f32 %v382, %v228
    %v384 = vadd.f32 %v380, %v383
    %s385 = sld [smem:[#allocation6 + $0x108]]
    %v386 = vstv %s385
    %v387 = vmul.f32 %v386, %v247
    %v388 = vadd.f32 %v384, %v387
    %s389 = sld [smem:[#allocation6 + $0x109]]
    %v390 = vstv %s389
    %v391 = vmul.f32 %v390, %v266
    %v392 = vadd.f32 %v388, %v391
    %v393 = vmax.f32 %v308, %v350
    %v394 = vmax.f32 %v393, %v392
    %v395 = vsub.f32 %v308, %v394
    %v396 = vmul.f32 %v395, 1.442695
    %v397 = vpow.pop %v396
    %v398 = vsub.f32 %v350, %v394
    %v399 = vmul.f32 %v398, 1.442695
    %v400 = vpow.pop %v399
    %v401 = vsub.f32 %v392, %v394
    %v402 = vmul.f32 %v401, 1.442695
    %v403 = vpow.pop %v402
    %v404 = vadd.f32 %v397, %v400
    %v405 = vadd.f32 %v404, %v403
    %v406 = vrcp.pop %v405
    %v407 = vmul.f32 1.0, %v406
    %v408 = vmul.f32 %v397, %v407
    %409 = vst [vmem:[%s5] sm:$0xff] %v408
    %v410 = vmul.f32 %v400, %v407
    %s411 = scalar_lea.vmem %s5, 8
    %412 = vst [vmem:[%s411] sm:$0xff] %v410
    %v413 = vmul.f32 %v403, %v407
    %s414 = scalar_lea.vmem %s5, 16
    %415 = vst [vmem:[%s414] sm:$0xff] %v413
    // Predicated region
    $region38: #{mlp_forward.1} parent=1 // pred_check
      _
    $region39: #{mlp_forward.1} parent=1 // pred_check_branch
      %417 = sbr.rel (0) target = $region41
    $region40: #{mlp_forward.1} parent=1 // pred_region
      _
    $region41: #{mlp_forward.1} parent=1 // pred_fallthru
      _
    // Predicated region
    $region42: #{mlp_forward.1} parent=1 // pred_check
      _
    $region43: #{mlp_forward.1} parent=1 // pred_check_branch
      %419 = sbr.rel (0) target = $region45
    $region44: #{mlp_forward.1} parent=1 // pred_region
      _
    $region45: #{mlp_forward.1} parent=1 // pred_fallthru
      _
    %420 = vsyncpa [#allocation3], 1
    %421 = vsyncpa [#allocation5], 1
    %422 = vsyncpa [#allocation8], 1

</llo_original>
